<compile_context>
chip_gen: v7x
topology: tpu7x:2x2x1
jax: 0.10.0
libtpu: 0.0.40
codegen_flags: <defaults>
</compile_context>

<pallas_src>
import jax
import jax.numpy as jnp
from jax.experimental import pallas as pl
from jax.experimental.pallas import tpu as pltpu

_LANE = 128


def _vad_ce_kernel(z_ref, len_ref, out_ref, acc_ref):
    k = pl.program_id(1)
    num_k = pl.num_programs(1)

    @pl.when(k == 0)
    def _():
        acc_ref[...] = jnp.zeros_like(acc_ref)

    z = z_ref[...].astype(jnp.float32)      # (tB, tS, 128): sign * (l0 - l1)
    lens = len_ref[...]                     # (tB, 1) int32 valid lengths
    tB, tS, _ = z.shape

    # 2-class cross entropy in closed form: ce = softplus(z).
    ce = jnp.maximum(z, 0.0) + jnp.log1p(jnp.exp(-jnp.abs(z)))

    # Valid-step mask.  Tile offset is folded into the per-row scalar (rel) rather
    # than added to the full-width iota.  Select (not multiply) so garbage in padded
    # / out-of-bounds regions can never produce NaN in the accumulator.
    local = (jax.lax.broadcasted_iota(jnp.int32, (tB, tS, _LANE), 1) * _LANE
             + jax.lax.broadcasted_iota(jnp.int32, (tB, tS, _LANE), 2))
    rel = lens.reshape(tB, 1, 1) - k * (tS * _LANE)
    acc_ref[...] += jnp.where(local < rel, ce, 0.0)

    @pl.when(k == num_k - 1)
    def _():
        col = jnp.sum(acc_ref[...], axis=1)               # (tB, 128) sublane reduce
        row_sum = jnp.sum(col, axis=1, keepdims=True)     # (tB, 1)   lane reduce
        lens_f = lens.astype(jnp.float32)
        # Mean over the valid steps of each row; rows with y_len == 0 contribute 0.
        out_ref[...] = jnp.where(lens > 0,
                                 row_sum / jnp.maximum(lens_f, 1.0),
                                 0.0)


def vad_cross_entropy_loss(y, t, y_len, *, target_tile_bytes=2 << 20,
                           tile_sublanes=None):
    """y: (T, B, C) float, t: (T, B, Ct) int, y_len: (B,) int -> scalar f32."""
    T, B, _ = y.shape

    # --- One fused wrapper relayout pass: a single f32 z-plane ------------------
    # z[time, b] = sign * (l0 - l1), sign = +1 if target==1 else -1.
    diff = (y[:, :, 0] - y[:, :, 1]).astype(jnp.float32)               # (T, B)
    sign = (2 * t[:, :, 0].astype(jnp.int32) - 1).astype(jnp.float32)  # (T, B)
    z = jnp.transpose(diff * sign)                                     # (B, T)

    # Pad only to the 128-lane boundary (needed for the (B, S, 128) view); the
    # kernel's select-mask covers padded and ragged-tile steps.
    S = pl.cdiv(T, _LANE)
    T_pad = S * _LANE
    if T_pad != T:
        z = jnp.pad(z, ((0, 0), (0, T_pad - T)))
    z = z.reshape(B, S, _LANE)        # pack time onto (sublane, lane)

    # Leading parallel batch-block axis: 2 blocks when B is even (uses both TCs on
    # v7x); a cheap sequential outer loop on v5e/v6e.
    nb = 2 if (B >= 2 and B % 2 == 0) else 1
    tB = B // nb

    # Sublane tile: multiple of 8 (or full S when S < 8), sized so each grid step
    # streams ~target_tile_bytes.  Double-buffered input (2x) + accumulator stay a
    # few MiB -> well under default scoped VMEM on v5e/v6e/v7x.
    if S < 8:
        tS = S
    else:
        if tile_sublanes is None:
            want = target_tile_bytes // (tB * _LANE * 4)
        else:
            want = int(tile_sublanes)
        want = max(8, (want // 8) * 8)
        tS = min(want, (S // 8) * 8)
    num_k = pl.cdiv(S, tS)

    lens = jnp.asarray(y_len).astype(jnp.int32).reshape(nb, tB, 1)

    per_row = pl.pallas_call(
        _vad_ce_kernel,
        out_shape=jax.ShapeDtypeStruct((nb, tB, 1), jnp.float32),
        grid=(nb, num_k),
        in_specs=[
            pl.BlockSpec((tB, tS, _LANE), lambda b, k: (b, k, 0)),  # z-plane
            pl.BlockSpec((None, tB, 1), lambda b, k: (b, 0, 0)),    # lengths (resident)
        ],
        out_specs=pl.BlockSpec((None, tB, 1), lambda b, k: (b, 0, 0)),
        scratch_shapes=[pltpu.VMEM((tB, tS, _LANE), jnp.float32)],
        compiler_params=pltpu.CompilerParams(
            dimension_semantics=("parallel", "arbitrary"),  # batch blocks | T reduction
        ),
    )(z, lens)

    # Zero-length rows contribute 0 in the numerator but the divisor is the FULL
    # batch size -- intentional, matches the PyTorch reference loop.
    return jnp.sum(per_row) / B


def _reference_loss(y, t, y_len):
    """Pure-JAX reference matching the PyTorch loop semantics."""
    T, B, _ = y.shape
    total = 0.0
    for i in range(B):
        L = int(y_len[i])
        if L == 0:
            continue
        logits = y[:L, i, 0:2].astype(jnp.float32)            # (L, 2)
        tgt = t[:L, i, 0].astype(jnp.int32)                   # (L,)
        lse = jax.nn.logsumexp(logits, axis=1)
        picked = jnp.take_along_axis(logits, tgt[:, None], axis=1)[:, 0]
        total = total + jnp.mean(lse - picked)
    return total / B


if __name__ == "__main__":
    key = jax.random.PRNGKey(0)
    k1, k2 = jax.random.split(key)

    # Small synthetic shapes; T chosen so the grid runs several T-tiles with a
    # ragged last block (S = 12 chunks of 128, tS = 8 -> 2 reduction steps), plus
    # 2 batch blocks on the parallel axis.
    T, B, C = 1500, 4, 4
    y = jax.random.normal(k1, (T, B, C), dtype=jnp.float32)
    t = jax.random.randint(k2, (T, B, 1), 0, 2, dtype=jnp.int32)
    y_len = jnp.array([1500, 700, 0, 250], dtype=jnp.int32)   # includes a zero-length seq

    loss = vad_cross_entropy_loss(y, t, y_len)
    loss = jax.block_until_ready(loss)

    ref = _reference_loss(y, t, y_len)
    assert jnp.allclose(loss, ref, atol=1e-4, rtol=1e-4), (loss, ref)

    print("KERNEL_OK")
</pallas_src>

<mosaic_0001>
module attributes {stable_mosaic.version = 11 : i64} {
  func.func @_vad_ce_kernel(%arg0: i32, %arg1: i32, %arg2: memref<2x8x128xf32, #tpu.memory_space<vmem>>, %arg3: memref<1x2x1xi32, #tpu.memory_space<vmem>>, %arg4: memref<1x2x1xf32, #tpu.memory_space<vmem>>, %arg5: memref<2x8x128xf32, #tpu.memory_space<vmem>>) attributes {dimension_semantics = [#tpu.dimension_semantics<parallel>, #tpu.dimension_semantics<arbitrary>], iteration_bounds = array<i64: 2, 2>, scalar_prefetch = 0 : i64, scratch_operands = 1 : i64, tpu.core_type = #tpu.core_type<tc>, window_params = [{transform_indices = @transform_0, window_bounds = array<i64: 2, 8, 128>}, {transform_indices = @transform_1, window_bounds = array<i64: 1, 2, 1>}, {transform_indices = @transform_2, window_bounds = array<i64: 1, 2, 1>}]} {
    %c0_i32 = arith.constant 0 : i32
    %0 = arith.cmpi eq, %arg1, %c0_i32 : i32
    %1 = arith.extui %0 : i1 to i32
    %c0_i32_0 = arith.constant 0 : i32
    %2 = arith.cmpi ne, %1, %c0_i32_0 : i32
    scf.if %2 {
      %cst_15 = arith.constant 0.000000e+00 : f32
      %33 = vector.broadcast %cst_15 : f32 to vector<2x8x128xf32>
      %c0_16 = arith.constant 0 : index
      %c0_17 = arith.constant 0 : index
      %c0_18 = arith.constant 0 : index
      %34 = vector.load %arg5[%c0_16, %c0_17, %c0_18] : memref<2x8x128xf32, #tpu.memory_space<vmem>>, vector<2x8x128xf32>
      tpu.vector_store %arg5[%c0_16, %c0_17, %c0_18], %33 {strides = array<i32>} : memref<2x8x128xf32, #tpu.memory_space<vmem>>, vector<2x8x128xf32>,
    } else {
    }
    %c0 = arith.constant 0 : index
    %c0_1 = arith.constant 0 : index
    %c0_2 = arith.constant 0 : index
    %3 = vector.load %arg2[%c0, %c0_1, %c0_2] : memref<2x8x128xf32, #tpu.memory_space<vmem>>, vector<2x8x128xf32>
    %c0_3 = arith.constant 0 : index
    %c0_4 = arith.constant 0 : index
    %c0_5 = arith.constant 0 : index
    %4 = vector.load %arg3[%c0_3, %c0_4, %c0_5] : memref<1x2x1xi32, #tpu.memory_space<vmem>>, vector<1x2x1xi32>
    %5 = vector.shape_cast %4 : vector<1x2x1xi32> to vector<2x1xi32>
    %cst = arith.constant 0.000000e+00 : f32
    %6 = vector.broadcast %cst : f32 to vector<2x8x128xf32>
    %7 = arith.maximumf %3, %6 : vector<2x8x128xf32>
    %8 = math.absf %3 : vector<2x8x128xf32>
    %cst_6 = arith.constant 0.000000e+00 : f32
    %9 = vector.broadcast %cst_6 : f32 to vector<2x8x128xf32>
    %10 = arith.subf %9, %8 : vector<2x8x128xf32>
    %11 = math.exp %10 : vector<2x8x128xf32>
    %12 = math.log1p %11 : vector<2x8x128xf32>
    %13 = arith.addf %7, %12 : vector<2x8x128xf32>
    %14 = tpu.iota {dimensions = array<i32: 1>} : vector<2x8x128xi32>
    %c128_i32 = arith.constant 128 : i32
    %15 = vector.broadcast %c128_i32 : i32 to vector<2x8x128xi32>
    %16 = arith.muli %14, %15 : vector<2x8x128xi32>
    %17 = tpu.iota {dimensions = array<i32: 2>} : vector<2x8x128xi32>
    %18 = arith.addi %16, %17 : vector<2x8x128xi32>
    %19 = vector.shape_cast %5 : vector<2x1xi32> to vector<2x1x1xi32>
    %c1024_i32 = arith.constant 1024 : i32
    %20 = arith.muli %arg1, %c1024_i32 : i32
    %21 = vector.broadcast %20 : i32 to vector<2x1x1xi32>
    %22 = arith.subi %19, %21 : vector<2x1x1xi32>
    %c0_7 = arith.constant 0 : index
    %c0_8 = arith.constant 0 : index
    %c0_9 = arith.constant 0 : index
    %23 = vector.load %arg5[%c0_7, %c0_8, %c0_9] : memref<2x8x128xf32, #tpu.memory_space<vmem>>, vector<2x8x128xf32>
    %24 = vector.broadcast %22 : vector<2x1x1xi32> to vector<2x8x128xi32>
    %25 = arith.cmpi slt, %18, %24 : vector<2x8x128xi32>
    %cst_10 = arith.constant 0.000000e+00 : f32
    %26 = vector.broadcast %cst_10 : f32 to vector<2x8x128xf32>
    %27 = arith.select %25, %13, %26 : vector<2x8x128xi1>, vector<2x8x128xf32>
    %28 = arith.addf %23, %27 : vector<2x8x128xf32>
    %c0_11 = arith.constant 0 : index
    %c0_12 = arith.constant 0 : index
    %c0_13 = arith.constant 0 : index
    %29 = vector.load %arg5[%c0_11, %c0_12, %c0_13] : memref<2x8x128xf32, #tpu.memory_space<vmem>>, vector<2x8x128xf32>
    tpu.vector_store %arg5[%c0_11, %c0_12, %c0_13], %28 {strides = array<i32>} : memref<2x8x128xf32, #tpu.memory_space<vmem>>, vector<2x8x128xf32>,
    %c1_i32 = arith.constant 1 : i32
    %30 = arith.cmpi eq, %arg1, %c1_i32 : i32
    %31 = arith.extui %30 : i1 to i32
    %c0_i32_14 = arith.constant 0 : i32
    %32 = arith.cmpi ne, %31, %c0_i32_14 : i32
    scf.if %32 {
      %c0_15 = arith.constant 0 : index
      %c0_16 = arith.constant 0 : index
      %c0_17 = arith.constant 0 : index
      %33 = vector.load %arg5[%c0_15, %c0_16, %c0_17] : memref<2x8x128xf32, #tpu.memory_space<vmem>>, vector<2x8x128xf32>
      %cst_18 = arith.constant dense<0.000000e+00> : vector<2x128xf32>
      %34 = vector.multi_reduction <add>, %33, %cst_18 [1] : vector<2x8x128xf32> to vector<2x128xf32>
      %cst_19 = arith.constant dense<0.000000e+00> : vector<2xf32>
      %35 = vector.multi_reduction <add>, %34, %cst_19 [1] : vector<2x128xf32> to vector<2xf32>
      %36 = vector.shape_cast %35 : vector<2xf32> to vector<2x1xf32>
      %37 = arith.sitofp %5 : vector<2x1xi32> to vector<2x1xf32>
      %c0_i32_20 = arith.constant 0 : i32
      %38 = vector.broadcast %c0_i32_20 : i32 to vector<2x1xi32>
      %39 = arith.cmpi sgt, %5, %38 : vector<2x1xi32>
      %cst_21 = arith.constant 1.000000e+00 : f32
      %40 = vector.broadcast %cst_21 : f32 to vector<2x1xf32>
      %41 = arith.maximumf %37, %40 : vector<2x1xf32>
      %42 = arith.divf %36, %41 : vector<2x1xf32>
      %cst_22 = arith.constant 0.000000e+00 : f32
      %43 = vector.broadcast %cst_22 : f32 to vector<2x1xf32>
      %44 = arith.select %39, %42, %43 : vector<2x1xi1>, vector<2x1xf32>
      %c0_23 = arith.constant 0 : index
      %c0_24 = arith.constant 0 : index
      %c0_25 = arith.constant 0 : index
      %45 = vector.load %arg4[%c0_23, %c0_24, %c0_25] : memref<1x2x1xf32, #tpu.memory_space<vmem>>, vector<1x2x1xf32>
      %46 = vector.shape_cast %45 : vector<1x2x1xf32> to vector<2x1xf32>
      %47 = vector.shape_cast %44 : vector<2x1xf32> to vector<1x2x1xf32>
      tpu.vector_store %arg4[%c0_23, %c0_24, %c0_25], %47 {strides = array<i32>} : memref<1x2x1xf32, #tpu.memory_space<vmem>>, vector<1x2x1xf32>,
    } else {
    }
    return
  }
  func.func @transform_0(%arg0: i32, %arg1: i32) -> (i32, i32, i32) {
    %c0_i32 = arith.constant 0 : i32
    %c0_i32_0 = arith.constant 0 : i32
    return %arg0, %arg1, %c0_i32 : i32, i32, i32
  }
  func.func @transform_1(%arg0: i32, %arg1: i32) -> (i32, i32, i32) {
    %c0_i32 = arith.constant 0 : i32
    %c0_i32_0 = arith.constant 0 : i32
    %c0_i32_1 = arith.constant 0 : i32
    return %arg0, %c0_i32, %c0_i32_0 : i32, i32, i32
  }
  func.func @transform_2(%arg0: i32, %arg1: i32) -> (i32, i32, i32) {
    %c0_i32 = arith.constant 0 : i32
    %c0_i32_0 = arith.constant 0 : i32
    %c0_i32_1 = arith.constant 0 : i32
    return %arg0, %c0_i32, %c0_i32_0 : i32, i32, i32
  }
}

</mosaic_0001>

<llo_original>
// kernel: tpu_custom_call.1
$region0: #{tpu_custom_call.1}
  #allocation0 [shape = 'u32[]', space=smem, size = 0x4, offset = 0x4, fixed_abs, tag = 'smem constant byte address 0x4 - core index']
  #allocation1 [shape = 'u32[144,128]{1,0:T(1,128)}', space=vmem, size = 0x12000, scoped, tag = 'internal scratch']
  #allocation2 [shape = 'f32[2,8,128]{2,1,0:T(8,128)}', space=vmem, size = 0x2000, scoped, tag = 'scratch operand']
  %s0 = inlined_call_operand.vmem [shape: f32[4,12,128], index: 0, kind: input, shape index: {}]
  %s1 = inlined_call_operand.vmem [shape: s32[2,2,1], index: 1, kind: input, shape index: {}]
  %s2 = inlined_call_operand.vmem [shape: f32[2,2,1], index: 2, kind: output, shape index: {}]
  %s3 = sld [smem:[#allocation0]]
  $region87: #{tpu_custom_call.1} parent=0
    _
  %s5 = ssub.s32 1, %s3
  %s6 = scalar_select 0, %s5, %s3
  $region1: #{tpu_custom_call.1} parent=0
    #allocation3 [shape = 'u8[16384]{0}', space=vmem, size = 0x4000, scoped, tag = 'input window, operand 0']
    loop: start=0, step=1, limit=6
    $region2: #{tpu_custom_call.1} parent=1 // loop_pre_header
      _
    $region3: #{tpu_custom_call.1} parent=1 // loop_header
      %s8 = sphi 0, %s12
      %p9 = scmp.ge.s32.totalorder %s8, 6
      %s15 = sphi 0, %s27
      %s16 = sphi 0, %s23
      %s17 = sphi 0, %s15
      %s18 = sphi 0, %s16
      %s19 = sphi 0, %s17
      %s20 = sphi 0, %s18
      %s32 = sphi 0, %s34
      %s35 = sphi 0, %s32
      %s36 = sphi 0, %s35
      %s52 = sphi 0, %s36
      %s58 = sphi 0, %s60
      %s61 = sphi 0, %s58
      %s62 = sphi 0, %s61
      %s78 = sphi 0, %s62
      %s84 = sphi 0, %s86
      %s87 = sphi 0, %s84
      %s88 = sphi 0, %s87
      %s104 = sphi 0, %s88
    $region4: #{tpu_custom_call.1} parent=1 // loop_header_branch
      %11 = sbr.rel (%p9) target = $region8
    $region5: #{tpu_custom_call.1} parent=1 // loop_body
      %s13 = ssub.s32 %s8, 1
      %s14 = ssub.s32 %s8, 2
      %s21 = sadd.s32 1, %s16
      %p22 = scmp.ge.s32.totalorder %s21, 2
      %s23 = scalar_select %p22, 0, %s21
      %s24 = sadd.s32 1, %s15
      %s25 = scalar_select %p22, %s24, %s15
      %p26 = scmp.ge.s32.totalorder %s25, 2
      %s27 = scalar_select %p26, 0, %s25
      %s28 = ssub.s32 %s15, %s27
      %s29 = ssub.s32 %s16, %s23
      %s30 = sor.u32 %s28, %s29
      %p31 = scmp.eq.s32.totalorder %s30, 0
      %s33 = sadd.s32 %s32, 1
      %s34 = scalar_select %p31, %s32, %s33
      %p37 = pneg %p31
      %p38 = scmp.eq.s32.totalorder %s8, 3
      %p39 = por %p37, %p38
      %p40 = scmp.ne.s32.totalorder %s32, %s35
      %p41 = scmp.eq.s32.totalorder %s8, 0
      %p42 = por %p40, %p41
      %p43 = scmp.ne.s32.totalorder %s32, %s35
      %p44 = scmp.eq.s32.totalorder %s13, 3
      %p45 = por %p43, %p44
      %p46 = scmp.ne.s32.totalorder %s35, %s36
      %p47 = scmp.eq.s32.totalorder %s13, 0
      %p48 = por %p46, %p47
      %p49 = scmp.ne.s32.totalorder %s35, %s36
      %p50 = scmp.eq.s32.totalorder %s14, 3
      %p51 = por %p49, %p50
      %p53 = scmp.ne.s32.totalorder %s36, %s52
      %p54 = scmp.eq.s32.totalorder %s14, 0
      %p55 = por %p53, %p54
      %s56 = ssub.s32 %s15, %s27
      %p57 = scmp.eq.s32.totalorder %s56, 0
      %s59 = sadd.s32 %s58, 1
      %s60 = scalar_select %p57, %s58, %s59
      %p63 = pneg %p57
      %p64 = scmp.eq.s32.totalorder %s8, 3
      %p65 = por %p63, %p64
      %p66 = scmp.ne.s32.totalorder %s58, %s61
      %p67 = scmp.eq.s32.totalorder %s8, 0
      %p68 = por %p66, %p67
      %p69 = scmp.ne.s32.totalorder %s58, %s61
      %p70 = scmp.eq.s32.totalorder %s13, 3
      %p71 = por %p69, %p70
      %p72 = scmp.ne.s32.totalorder %s61, %s62
      %p73 = scmp.eq.s32.totalorder %s13, 0
      %p74 = por %p72, %p73
      %p75 = scmp.ne.s32.totalorder %s61, %s62
      %p76 = scmp.eq.s32.totalorder %s14, 3
      %p77 = por %p75, %p76
      %p79 = scmp.ne.s32.totalorder %s62, %s78
      %p80 = scmp.eq.s32.totalorder %s14, 0
      %p81 = por %p79, %p80
      %s82 = ssub.s32 %s15, %s27
      %p83 = scmp.eq.s32.totalorder %s82, 0
      %s85 = sadd.s32 %s84, 1
      %s86 = scalar_select %p83, %s84, %s85
      %p89 = pneg %p83
      %p90 = scmp.eq.s32.totalorder %s8, 3
      %p91 = por %p89, %p90
      %p92 = scmp.ne.s32.totalorder %s84, %s87
      %p93 = scmp.eq.s32.totalorder %s8, 0
      %p94 = por %p92, %p93
      %p95 = scmp.ne.s32.totalorder %s84, %s87
      %p96 = scmp.eq.s32.totalorder %s13, 3
      %p97 = por %p95, %p96
      %p98 = scmp.ne.s32.totalorder %s87, %s88
      %p99 = scmp.eq.s32.totalorder %s13, 0
      %p100 = por %p98, %p99
      %p101 = scmp.ne.s32.totalorder %s87, %s88
      %p102 = scmp.eq.s32.totalorder %s14, 3
      %p103 = por %p101, %p102
      %p105 = scmp.ne.s32.totalorder %s88, %s104
      %p106 = scmp.eq.s32.totalorder %s14, 0
      %p107 = por %p105, %p106
      %p108 = scmp.le.s32.totalorder 1, %s8
      %p109 = scmp.lt.s32.totalorder %s8, 5
      %p110 = pnand %p108, %p109
      %p111 = pneg %p110
      // Predicated region
      $region9: #{tpu_custom_call.1} parent=5 // pred_check
        _
      $region10: #{tpu_custom_call.1} parent=5 // pred_check_branch
        %113 = sbr.rel (%p110) target = $region12
      $region11: #{tpu_custom_call.1} parent=5 // pred_region
        %s114 = ssub.s32 %s8, 1
      $region12: #{tpu_custom_call.1} parent=5 // pred_fallthru
        _
      %p115 = scmp.lt.s32.totalorder %s8, 4
      // Predicated region
      $region13: #{tpu_custom_call.1} parent=5 // pred_check
        %p116 = pneg %p115
      $region14: #{tpu_custom_call.1} parent=5 // pred_check_branch
        %118 = sbr.rel (%p116) target = $region16
      $region15: #{tpu_custom_call.1} parent=5 // pred_region
        // Predicated region
        $region17: #{tpu_custom_call.1} parent=15 // pred_check
          %p119 = pneg %p42
        $region18: #{tpu_custom_call.1} parent=15 // pred_check_branch
          %121 = sbr.rel (%p119) target = $region20
        $region19: #{tpu_custom_call.1} parent=15 // pred_region
          %s122 = sand.u32 %s32, 1
          %s123 = sand.u32 %s32, 1
          %s124 = smul.addr %s123, 16
          %s125 = scalar_lea.vmem [#allocation3], %s124
          %s126 = smul.u32 2, %s15
          %s127 = smul.addr %s126, 2
          %s128 = sadd.s32 %s16, %s127
          %s129 = smul.addr %s128, 8
          %s130 = scalar_lea.vmem %s0, %s129
          // Predicated region
          $region21: #{tpu_custom_call.1} parent=19 // pred_check
            _
          $region22: #{tpu_custom_call.1} parent=19 // pred_check_branch
            %132 = sbr.rel (0) target = $region24
          $region23: #{tpu_custom_call.1} parent=19 // pred_region
            // Predicated region
            $region25: #{tpu_custom_call.1} parent=23 // pred_check
              _
            $region26: #{tpu_custom_call.1} parent=23 // pred_check_branch
              %134 = sbr.rel (0) target = $region28
            $region27: #{tpu_custom_call.1} parent=23 // pred_region
              // Predicated region
              $region40: #{tpu_custom_call.1} parent=27 // pred_check
                _
              $region41: #{tpu_custom_call.1} parent=27 // pred_check_branch
                %151 = sbr.rel (0) target = $region43
              $region42: #{tpu_custom_call.1} parent=27 // pred_region
                loop: start=0, step=1, limit=1
                $region44: #{tpu_custom_call.1} parent=42 // loop_pre_header
                  _
                $region45: #{tpu_custom_call.1} parent=42 // loop_header
                  %s153 = sphi 0, %s157
                  %p154 = scmp.ge.s32.totalorder %s153, 1
                  %s158 = sphi %s130, %s130
                  %s159 = sphi %s125, %s125
                $region46: #{tpu_custom_call.1} parent=42 // loop_header_branch
                  %156 = sbr.rel (%p154) target = $region50
                $region47: #{tpu_custom_call.1} parent=42 // loop_body
                  %v160 = vld [vmem:[%s158] sm:$0xff]
                  %161 = vst [vmem:[%s159] sm:$0xff] %v160
                  %v162 = vld [vmem:[%s158 + $0x10] sm:$0xff]
                  %163 = vst [vmem:[%s159 + $0x8] sm:$0xff] %v162
                $region48: #{tpu_custom_call.1} parent=42 // loop_footer
                  %s157 = sadd.s32 1, %s153
                $region49: #{tpu_custom_call.1} parent=42 // loop_footer_branch
                  %152 = sbr.rel target = $region45
                $region50: #{tpu_custom_call.1} parent=42 // loop_exit
                  _
              $region43: #{tpu_custom_call.1} parent=27 // pred_fallthru
                _
              // Predicated region
              $region51: #{tpu_custom_call.1} parent=27 // pred_check
                _
              $region52: #{tpu_custom_call.1} parent=27 // pred_check_branch
                %165 = sbr.rel target = $region54
              $region53: #{tpu_custom_call.1} parent=27 // pred_region
                _
              $region54: #{tpu_custom_call.1} parent=27 // pred_fallthru
                _
            $region28: #{tpu_custom_call.1} parent=23 // pred_fallthru
              _
            // Predicated region
            $region29: #{tpu_custom_call.1} parent=23 // pred_check
              _
            $region30: #{tpu_custom_call.1} parent=23 // pred_check_branch
              %136 = sbr.rel target = $region32
            $region31: #{tpu_custom_call.1} parent=23 // pred_region
              loop: start=0, step=1, limit=1
              $region33: #{tpu_custom_call.1} parent=31 // loop_pre_header
                _
              $region34: #{tpu_custom_call.1} parent=31 // loop_header
                %s139 = sphi 0, %s143
                %p140 = scmp.ge.s32.totalorder %s139, 1
                %s144 = sphi %s130, %s130
                %s145 = sphi %s125, %s125
              $region35: #{tpu_custom_call.1} parent=31 // loop_header_branch
                %142 = sbr.rel (%p140) target = $region39
              $region36: #{tpu_custom_call.1} parent=31 // loop_body
                %v146 = vld [vmem:[%s144] sm:$0xff]
                %147 = vst [vmem:[%s145] sm:$0xff] %v146
                %v148 = vld [vmem:[%s144 + $0x10] sm:$0xff]
                %149 = vst [vmem:[%s145 + $0x8] sm:$0xff] %v148
              $region37: #{tpu_custom_call.1} parent=31 // loop_footer
                %s143 = sadd.s32 1, %s139
              $region38: #{tpu_custom_call.1} parent=31 // loop_footer_branch
                %138 = sbr.rel target = $region34
              $region39: #{tpu_custom_call.1} parent=31 // loop_exit
                _
            $region32: #{tpu_custom_call.1} parent=23 // pred_fallthru
              _
          $region24: #{tpu_custom_call.1} parent=19 // pred_fallthru
            _
          %166 = vnop
        $region20: #{tpu_custom_call.1} parent=15 // pred_fallthru
          _
        // Predicated region
        $region55: #{tpu_custom_call.1} parent=15 // pred_check
          %p167 = pneg %p68
        $region56: #{tpu_custom_call.1} parent=15 // pred_check_branch
          %169 = sbr.rel (%p167) target = $region58
        $region57: #{tpu_custom_call.1} parent=15 // pred_region
          %p170 = scmp.lt.s32.totalorder %s15, 1
          %s171 = scalar_select %p170, %s15, 1
          %s172 = smul.addr %s171, 2
          %s173 = scalar_lea.vmem %s1, %s172
        $region58: #{tpu_custom_call.1} parent=15 // pred_fallthru
          _
      $region16: #{tpu_custom_call.1} parent=5 // pred_fallthru
        _
      %p174 = scmp.le.s32.totalorder 1, %s8
      %p175 = scmp.lt.s32.totalorder %s8, 5
      %p176 = pnand %p174, %p175
      %p177 = pneg %p176
      // Predicated region
      $region59: #{tpu_custom_call.1} parent=5 // pred_check
        _
      $region60: #{tpu_custom_call.1} parent=5 // pred_check_branch
        %179 = sbr.rel (%p176) target = $region62
      $region61: #{tpu_custom_call.1} parent=5 // pred_region
        %s180 = ssub.s32 %s8, 1
        %s181 = sand.u32 %s35, 1
        %s182 = sand.u32 %s35, 1
        %s183 = smul.addr %s182, 16
        %s184 = scalar_lea.vmem [#allocation3], %s183
        // Predicated region
        $region63: #{tpu_custom_call.1} parent=61 // pred_check
          %p185 = pneg %p48
        $region64: #{tpu_custom_call.1} parent=61 // pred_check_branch
          %187 = sbr.rel (%p185) target = $region66
        $region65: #{tpu_custom_call.1} parent=61 // pred_region
          _
        $region66: #{tpu_custom_call.1} parent=61 // pred_fallthru
          _
        %s188 = sand.u32 %s35, 1
        %s189 = sand.u32 %s35, 1
        %s190 = smul.addr %s189, 16
        %s191 = scalar_lea.vmem [#allocation3], %s190
        %p192 = pneg %p48
        %p193 = pneg %p45
        %p194 = scmp.lt.s32.totalorder %s17, 1
        %s195 = scalar_select %p194, %s17, 1
        %s196 = smul.addr %s195, 2
        %s197 = scalar_lea.vmem %s1, %s196
        %p198 = pneg %p74
        %p199 = pneg %p71
        %p200 = pneg %p100
        %p201 = pneg %p97
        %p202 = scmp.lt.s32.totalorder %s17, 1
        %s203 = scalar_select %p202, %s17, 1
        %s204 = smul.addr %s203, 2
        %s205 = scalar_lea.vmem %s2, %s204
        %s206 = smul.u32 2, %s17
        %p207 = scmp.lt.s32.totalorder %s17, 1
        %s208 = scalar_select %p207, %s17, 1
        %s209 = smul.addr %s208, 2
        %s210 = scalar_lea.vmem %s1, %s209
        %p211 = scmp.lt.s32.totalorder %s17, 1
        %s212 = scalar_select %p211, %s17, 1
        %s213 = smul.addr %s212, 2
        %s214 = scalar_lea.vmem %s2, %s213
        %p215 = scmp.eq.s32.totalorder %s18, 0
        // Predicated region
        $region67: #{tpu_custom_call.1} parent=61 // pred_check
          %p216 = pneg %p215
        $region68: #{tpu_custom_call.1} parent=61 // pred_check_branch
          %218 = sbr.rel (%p216) target = $region70
        $region69: #{tpu_custom_call.1} parent=61 // pred_region
          %219 = vst [vmem:[#allocation2] sm:$0xff] 0.0
          %220 = vst [vmem:[#allocation2 + $0x8] sm:$0xff] 0.0
        $region70: #{tpu_custom_call.1} parent=61 // pred_fallthru
          _
        %v221 = vld [vmem:[%s184] sm:$0xff]
        %v222 = vld [vmem:[%s184 + $0x8] sm:$0xff]
        %v223 = vld [vmem:[%s210] sm:$0x3]
        %v224 = vmax.f32 %v221, 0.0
        %v225 = vmax.f32 %v222, 0.0
        %v226 = vand.u32 2147483647, %v221
        %v227 = vand.u32 2147483647, %v222
        %v228 = vsub.f32 0.0, %v226
        %v229 = vsub.f32 0.0, %v227
        %v230 = vmul.f32 %v228, 1.442695
        %v231 = vpow.pop %v230
        %v232 = vmul.f32 %v229, 1.442695
        %v233 = vpow.pop %v232
        %v234 = vadd.f32 %v231, 1.0
        %v235 = vlog2.pop %v234
        %v236 = vmul.f32 %v235, 0.6931472
        %v237 = vmul.f32 -0.5, %v231
        %v238 = vadd.f32 %v237, 1.0
        %v239 = vmul.f32 %v238, %v231
        %v240 = vand.u32 2147483647, %v231
        %vm241 = vcmp.lt.f32.partialorder %v240, 0.0004427343
        %v242 = vsel %vm241, %v239, %v236
        %v243 = vadd.f32 %v233, 1.0
        %v244 = vlog2.pop %v243
        %v245 = vmul.f32 %v244, 0.6931472
        %v246 = vmul.f32 -0.5, %v233
        %v247 = vadd.f32 %v246, 1.0
        %v248 = vmul.f32 %v247, %v233
        %v249 = vand.u32 2147483647, %v233
        %vm250 = vcmp.lt.f32.partialorder %v249, 0.0004427343
        %v251 = vsel %vm250, %v248, %v245
        %v252 = vadd.f32 %v224, %v242
        %v253 = vadd.f32 %v225, %v251
        %v254 = vlaneseq
        %v255 = vshrl.u32 %v254, 7
        %v256 = vmul.u32 %v255, 128
        %v257 = vlaneseq
        %v258 = vand.u32 %v257, 127
        %v259 = vadd.s32 %v256, %v258
        %v261 = vunpack.c.l.s4 1966171168
        %v262 = vunpack.c.0.s8 %v261
        %v263 = vlaneseq
        %v264 = vshrl.u32 %v263, 7
        %v265 = vsub.s32 %v262, %v264
        %v266 = vrot.slane %v223, %v265
        %v267 = vcombine.high %v266, %v266
        %v269 = vunpack.c.l.s4 1966171168
        %v270 = vunpack.c.0.s8 %v269
        %v271 = vlaneseq
        %v272 = vshrl.u32 %v271, 7
        %v273 = vsub.s32 %v270, %v272
        %v274 = vrot.slane %v266, %v273
        %v276 = vunpack.c.l.s4 1966171168
        %v277 = vunpack.c.0.s8 %v276
        %v278 = vlaneseq
        %v279 = vshrl.u32 %v278, 7
        %v280 = vsub.s32 %v277, %v279
        %v281 = vrot.slane %v267, %v280
        %s282 = smul.u32 %s18, 1024
        %v283 = vstv %s282
        %v284 = vsub.s32 %v274, %v283
        %v285 = vsub.s32 %v281, %v283
        %v286 = vld [vmem:[#allocation2] sm:$0xff]
        %v287 = vld [vmem:[#allocation2 + $0x8] sm:$0xff]
        %v288 = vlaneseq
        %v289 = vshrl.u32 %v288, 7
        %v290 = vsub.s32 0, %v289
        %v291 = vrot.slane %v284, %v290
        %v292 = vlaneseq
        %v293 = vshrl.u32 %v292, 7
        %v294 = vsub.s32 0, %v293
        %v295 = vrot.slane %v285, %v294
        %296 = vset.pattern.permute.xlu0 0
        %297 = vperm.xlu0 %296, %v291
        %v298 = vpop.permute.xlu0 %297
        %299 = vset.pattern.permute.xlu0 0
        %300 = vperm.xlu0 %299, %v295
        %v301 = vpop.permute.xlu0 %300
        %vm302 = vcmp.lt.s32.totalorder %v259, %v298
        %vm303 = vcmp.lt.s32.totalorder %v259, %v301
        %v304 = vsel %vm302, %v252, 0.0
        %v305 = vsel %vm303, %v253, 0.0
        %v306 = vadd.f32 %v286, %v304
        %v307 = vadd.f32 %v287, %v305
        %308 = vst [vmem:[#allocation2] sm:$0xff] %v306
        %309 = vst [vmem:[#allocation2 + $0x8] sm:$0xff] %v307
        %p310 = scmp.eq.s32.totalorder %s18, 1
        // Predicated region
        $region71: #{tpu_custom_call.1} parent=61 // pred_check
          %p311 = pneg %p310
        $region72: #{tpu_custom_call.1} parent=61 // pred_check_branch
          %313 = sbr.rel (%p311) target = $region74
        $region73: #{tpu_custom_call.1} parent=61 // pred_region
          %v314 = vld [vmem:[#allocation2] sm:$0xff]
          %v315 = vld [vmem:[#allocation2 + $0x8] sm:$0xff]
          %v316 = vrot.slane %v314, 4
          %v317 = vadd.f32 %v314, %v316
          %v318 = vrot.slane %v317, 2
          %v319 = vadd.f32 %v317, %v318
          %v320 = vrot.slane %v319, 1
          %v321 = vadd.f32 %v319, %v320
          %v322 = vrot.slane %v315, 4
          %v323 = vadd.f32 %v315, %v322
          %v324 = vrot.slane %v323, 2
          %v325 = vadd.f32 %v323, %v324
          %v326 = vrot.slane %v325, 1
          %v327 = vadd.f32 %v325, %v326
          %vm330 = vcmask 1041409
          %v331 = vsel %vm330, %v327, %v321
          %vm333 = vcmask 1041408
          %v334 = vsel %vm333, %v331, 0.0
          %335 = vadd.xlane.f32.xlu0 %v334
          %v336 = vpop.xlane.xlu0 %335
          %v337 = vcvt.s32.f32 %v223
          %vm338 = vcmp.gt.s32.totalorder %v223, 0
          %v339 = vmax.f32 %v337, 1.0
          %v340 = vrcp.pop %v339
          %v341 = vmul.f32 %v336, %v340
          %v342 = vsel %vm338, %v341, 0.0
          %vm343 = vcmask 1024
          %344 = vst.msk [vmem:[%s214] sm:$0x3] %vm343, %v342
        $region74: #{tpu_custom_call.1} parent=61 // pred_fallthru
          _
        %p345 = scmp.lt.s32.totalorder %s17, 1
        %s346 = scalar_select %p345, %s17, 1
        %s347 = smul.addr %s346, 2
        %s348 = scalar_lea.vmem %s2, %s347
        // Predicated region
        $region75: #{tpu_custom_call.1} parent=61 // pred_check
          %p349 = pneg %p97
        $region76: #{tpu_custom_call.1} parent=61 // pred_check_branch
          %351 = sbr.rel (%p349) target = $region78
        $region77: #{tpu_custom_call.1} parent=61 // pred_region
          _
        $region78: #{tpu_custom_call.1} parent=61 // pred_fallthru
          _
      $region62: #{tpu_custom_call.1} parent=5 // pred_fallthru
        _
      %p352 = scmp.le.s32.totalorder 2, %s8
      // Predicated region
      $region79: #{tpu_custom_call.1} parent=5 // pred_check
        %p353 = pneg %p352
      $region80: #{tpu_custom_call.1} parent=5 // pred_check_branch
        %355 = sbr.rel (%p353) target = $region82
      $region81: #{tpu_custom_call.1} parent=5 // pred_region
        %s356 = ssub.s32 %s8, 2
        // Predicated region
        $region83: #{tpu_custom_call.1} parent=81 // pred_check
          %p357 = pneg %p103
        $region84: #{tpu_custom_call.1} parent=81 // pred_check_branch
          %359 = sbr.rel (%p357) target = $region86
        $region85: #{tpu_custom_call.1} parent=81 // pred_region
          %p360 = scmp.lt.s32.totalorder %s19, 1
          %s361 = scalar_select %p360, %s19, 1
          %s362 = smul.addr %s361, 2
          %s363 = scalar_lea.vmem %s2, %s362
        $region86: #{tpu_custom_call.1} parent=81 // pred_fallthru
          _
      $region82: #{tpu_custom_call.1} parent=5 // pred_fallthru
        _
    $region6: #{tpu_custom_call.1} parent=1 // loop_footer
      %s12 = sadd.s32 1, %s8
    $region7: #{tpu_custom_call.1} parent=1 // loop_footer_branch
      %7 = sbr.rel target = $region3
    $region8: #{tpu_custom_call.1} parent=1 // loop_exit
      _

</llo_original>
